<compile_context>
chip_gen: v7x
topology: tpu7x:2x2x1
jax: 0.10.0
libtpu: 0.0.40
codegen_flags: <defaults>
</compile_context>

<pallas_src>
import math
from functools import partial

import jax
import jax.numpy as jnp
from jax.experimental import pallas as pl
from jax.experimental.pallas import tpu as pltpu


# MXU operand dtype (accumulation is always f32 via preferred_element_type).
# Set to jnp.float32 to reproduce the reference more closely at lower throughput.
_MATMUL_DTYPE = jnp.bfloat16
_LANE = 128


def _round_up(x, m):
    return ((x + m - 1) // m) * m


_VMEM_LIMIT_CACHE = [None]


def _vmem_limit_bytes():
    """~75% of physical VMEM: 96 MiB on 128-MiB parts (v5e/v6e), 48 MiB on v7x."""
    if _VMEM_LIMIT_CACHE[0] is None:
        try:
            cap = int(pltpu.get_tpu_info().vmem_capacity_bytes)
        except Exception:
            cap = 64 * 1024 * 1024          # conservative fallback (v7x physical size)
        _VMEM_LIMIT_CACHE[0] = max(32 * 1024 * 1024, (cap * 3) // 4)
    return _VMEM_LIMIT_CACHE[0]


def _pick_row_tile(n, target):
    """Largest tile <= target that divides n and is a multiple of 8, else n (full)."""
    if n <= target:
        return n
    for t in (target, 512, 256, 128, 64, 32, 16, 8):
        if t <= target and n % t == 0:
            return t
    return n


def _pick_col_tile(n, target=256):
    """Lane-dense (multiple-of-128) column tile, else the full extent."""
    if n <= target:
        return n
    for t in (target, 128):
        if n % t == 0:
            return t
    return n


# ---------------------------------------------------------------------------
# Generic tiled linear kernel:  out = x @ W + b   (cross-attention fallback only)
# Weights arrive already in the MXU operand dtype; bias stays f32.
# ---------------------------------------------------------------------------
def _linear_kernel(x_ref, w_ref, b_ref, o_ref):
    x = x_ref[...].astype(w_ref.dtype)
    y = jnp.dot(x, w_ref[...], preferred_element_type=jnp.float32) + b_ref[...]
    o_ref[...] = y.astype(o_ref.dtype)


def pallas_linear(x2d, w, b, *, out_dtype=jnp.float32, tm_target=512, tn_target=256):
    N, Din = x2d.shape
    Dout = w.shape[1]
    tm = _pick_row_tile(N, tm_target)
    tn = _pick_col_tile(Dout, tn_target)
    grid = (N // tm, Dout // tn)
    return pl.pallas_call(
        _linear_kernel,
        grid=grid,
        in_specs=[
            pl.BlockSpec((tm, Din), lambda i, j: (i, 0)),
            pl.BlockSpec((Din, tn), lambda i, j: (0, j)),
            pl.BlockSpec((1, tn), lambda i, j: (0, j)),
        ],
        out_specs=pl.BlockSpec((tm, tn), lambda i, j: (i, j)),
        out_shape=jax.ShapeDtypeStruct((N, Dout), out_dtype),
        compiler_params=pltpu.CompilerParams(
            dimension_semantics=("parallel", "parallel"),
            vmem_limit_bytes=_vmem_limit_bytes()),
    )(x2d, w, b)


# ---------------------------------------------------------------------------
# Fused Q/K/V/sigma projection (self-attention fast path):
# one wide matmul per row tile; result is sliced into the four outputs.
# ---------------------------------------------------------------------------
def _fused_proj_kernel(x_ref, w_ref, b_ref, q_ref, k_ref, v_ref, s_ref, *, d_qk, d_v):
    x = x_ref[...].astype(w_ref.dtype)                       # (TM, d_model)
    y = jnp.dot(x, w_ref[...], preferred_element_type=jnp.float32) + b_ref[...]
    q_ref[...] = y[:, :d_qk].astype(q_ref.dtype)             # scale already folded in
    k_ref[...] = y[:, d_qk:2 * d_qk].astype(k_ref.dtype)
    v_ref[...] = y[:, 2 * d_qk:2 * d_qk + d_v].astype(v_ref.dtype)
    s_ref[...] = y[:, 2 * d_qk + d_v:].astype(s_ref.dtype)


def fused_qkvs_projection(x2d, w_cat, b_cat, *, d_qk, d_v, d_s, tm_target=512):
    N, Din = x2d.shape
    total = w_cat.shape[1]
    assert total == 2 * d_qk + d_v + d_s
    tm = _pick_row_tile(N, tm_target)
    grid = (N // tm,)
    kern = partial(_fused_proj_kernel, d_qk=d_qk, d_v=d_v)
    return pl.pallas_call(
        kern,
        grid=grid,
        in_specs=[
            pl.BlockSpec((tm, Din), lambda i: (i, 0)),
            pl.BlockSpec((Din, total), lambda i: (0, 0)),
            pl.BlockSpec((1, total), lambda i: (0, 0)),
        ],
        out_specs=(
            pl.BlockSpec((tm, d_qk), lambda i: (i, 0)),
            pl.BlockSpec((tm, d_qk), lambda i: (i, 0)),
            pl.BlockSpec((tm, d_v), lambda i: (i, 0)),
            pl.BlockSpec((tm, d_s), lambda i: (i, 0)),
        ),
        out_shape=(
            jax.ShapeDtypeStruct((N, d_qk), _MATMUL_DTYPE),   # q (bf16, scaled)
            jax.ShapeDtypeStruct((N, d_qk), _MATMUL_DTYPE),   # k (bf16)
            jax.ShapeDtypeStruct((N, d_v), _MATMUL_DTYPE),    # v (bf16)
            jax.ShapeDtypeStruct((N, d_s), jnp.float32),      # sigma (f32)
        ),
        compiler_params=pltpu.CompilerParams(
            dimension_semantics=("parallel",),
            vmem_limit_bytes=_vmem_limit_bytes()),
    )(x2d, w_cat, b_cat)


# ---------------------------------------------------------------------------
# Anomaly-attention kernel with fused output projection.
# Grid: (batch, query-tile); all heads per grid step; q/k/v stay in the
# projection layout [B, L, H*E] (no head-split transposes).
# ---------------------------------------------------------------------------
def _anomaly_attn_kernel(q_ref, k_ref, v_ref, sig_ref, wo_ref, bo_ref,
                         out_ref, series_ref, prior_ref, sigma_ref, ctx_ref,
                         *, n_heads, d_keys, d_values, s_valid):
    qt = pl.program_id(1)

    q = q_ref[0]            # (TQ, H*E)  bf16 (softmax scale folded into W_q)
    k = k_ref[0]            # (S,  H*E)  bf16
    v = v_ref[0]            # (S,  H*Dv) bf16
    sig = sig_ref[0]        # (TQ, H)    f32
    tq = q.shape[0]
    s_pad = k.shape[0]

    # sigma transform for all heads at once:  3**(sigmoid(5*sigma)+1e-5) - 1
    s_all = jnp.exp((jax.nn.sigmoid(sig * 5.0) + 1e-5) * math.log(3.0)) - 1.0  # (TQ, H)
    sigma_ref[0] = s_all    # compact (TQ, H) write; broadcast happens in the wrapper

    # -dist^2 / 2, generated in-kernel from iotas (no (L, L) HBM input).
    row = jax.lax.broadcasted_iota(jnp.int32, (tq, s_pad), 0) + qt * tq
    col = jax.lax.broadcasted_iota(jnp.int32, (tq, s_pad), 1)
    diff = (row - col).astype(jnp.float32)
    neg_half_d2 = -0.5 * diff * diff                                           # (TQ, S)

    # Additive softmax mask for zero-padded key positions (static no-op if none).
    if s_valid < s_pad:
        mask_bias = jnp.where(col < s_valid, jnp.float32(0.0),
                              jnp.float32(-1e30)).astype(jnp.float32)
    else:
        mask_bias = None

    inv_sqrt_2pi = 1.0 / math.sqrt(2.0 * math.pi)

    for h in range(n_heads):                         # static unroll over heads
        q_h = q[:, h * d_keys:(h + 1) * d_keys]
        k_h = k[:, h * d_keys:(h + 1) * d_keys]
        v_h = v[:, h * d_values:(h + 1) * d_values]

        # scaled dot-product scores (scale already folded into q), f32 accumulation
        scores = jax.lax.dot_general(
            q_h, k_h, (((1,), (1,)), ((), ())),
            preferred_element_type=jnp.float32)      # (TQ, S)
        if mask_bias is not None:
            scores = scores + mask_bias

        # softmax over keys -> "series" (f32; exact (TQ,1) reciprocal)
        m = jnp.max(scores, axis=-1, keepdims=True)
        e = jnp.exp(scores - m)
        series_h = e * (1.0 / jnp.sum(e, axis=-1, keepdims=True))

        # Gaussian prior from index distances (f32; exact (TQ,1) reciprocal)
        s_h = s_all[:, h:h + 1]                      # (TQ, 1)
        inv_s = 1.0 / s_h
        prior_h = (inv_sqrt_2pi * inv_s) * jnp.exp(neg_half_d2 * (inv_s * inv_s))

        # attention output (bf16 operands, f32 accumulation)
        out_h = jnp.dot(series_h.astype(_MATMUL_DTYPE), v_h,
                        preferred_element_type=jnp.float32)   # (TQ, Dv)

        series_ref[0, h] = series_h
        prior_ref[0, h] = prior_h
        # Bounded liveness: drop each head's context into the VMEM scratch at once.
        ctx_ref[:, h * d_values:(h + 1) * d_values] = out_h.astype(ctx_ref.dtype)

    # Fused output projection: one wide matmul over the merged-head context.
    out_ref[0] = (jnp.dot(ctx_ref[...], wo_ref[...],
                          preferred_element_type=jnp.float32)
                  + bo_ref[...]).astype(out_ref.dtype)


def _choose_attn_tile(l_pad, s_pad, h, e, dv, d_model, vmem_limit):
    """Largest tq in {512,256,128} whose double-buffered blocks fit the VMEM budget."""
    budget = int(vmem_limit * 0.6)
    fixed = (2 * s_pad * h * e * 2          # K block (bf16, double-buffered)
             + 2 * s_pad * h * dv * 2       # V block
             + 2 * h * dv * d_model * 2     # W_o
             + 2 * d_model * 4)             # b_o
    per_row = (2 * h * e * 2                # q tile
               + 2 * h * 4                  # sigma input tile
               + 2 * d_model * 4            # fused output tile
               + 2 * 2 * h * s_pad * 4      # series + prior tiles (dominant)
               + 2 * h * 4                  # sigma output tile
               + h * dv * 2                 # ctx scratch (single-buffered)
               + 8 * s_pad * 4)             # in-kernel f32 temporaries slack
    for tq in (512, 256, 128):
        if tq <= l_pad and l_pad % tq == 0 and fixed + tq * per_row <= budget:
            return tq
    return min(l_pad, _LANE)                # l_pad is a multiple of 128


def anomaly_attention(q, k, v, sig, wo, bo, *, n_heads, d_keys, d_values, d_model,
                      s_valid):
    # q: [B, Lp, H*E] bf16, k: [B, Sp, H*E] bf16, v: [B, Sp, H*Dv] bf16,
    # sig: [B, Lp, H] f32, wo: [H*Dv, d_model] bf16, bo: [1, d_model] f32
    B, L_pad, _ = q.shape
    S_pad = k.shape[1]
    H, E, Dv = n_heads, d_keys, d_values
    vmem_limit = _vmem_limit_bytes()
    tq = _choose_attn_tile(L_pad, S_pad, H, E, Dv, d_model, vmem_limit)
    grid = (B, L_pad // tq)
    kern = partial(_anomaly_attn_kernel, n_heads=H, d_keys=E, d_values=Dv,
                   s_valid=s_valid)

    out_shape = (
        jax.ShapeDtypeStruct((B, L_pad, d_model), jnp.float32),   # projected output
        jax.ShapeDtypeStruct((B, H, L_pad, S_pad), jnp.float32),  # series
        jax.ShapeDtypeStruct((B, H, L_pad, S_pad), jnp.float32),  # prior
        jax.ShapeDtypeStruct((B, L_pad, H), jnp.float32),         # sigma (compact)
    )
    return pl.pallas_call(
        kern,
        grid=grid,
        in_specs=[
            pl.BlockSpec((1, tq, H * E), lambda b, qt: (b, qt, 0)),
            pl.BlockSpec((1, S_pad, H * E), lambda b, qt: (b, 0, 0)),
            pl.BlockSpec((1, S_pad, H * Dv), lambda b, qt: (b, 0, 0)),
            pl.BlockSpec((1, tq, H), lambda b, qt: (b, qt, 0)),
            pl.BlockSpec((H * Dv, d_model), lambda b, qt: (0, 0)),
            pl.BlockSpec((1, d_model), lambda b, qt: (0, 0)),
        ],
        out_specs=(
            pl.BlockSpec((1, tq, d_model), lambda b, qt: (b, qt, 0)),
            pl.BlockSpec((1, H, tq, S_pad), lambda b, qt: (b, 0, qt, 0)),
            pl.BlockSpec((1, H, tq, S_pad), lambda b, qt: (b, 0, qt, 0)),
            pl.BlockSpec((1, tq, H), lambda b, qt: (b, qt, 0)),
        ),
        out_shape=out_shape,
        scratch_shapes=[pltpu.VMEM((tq, H * Dv), _MATMUL_DTYPE)],
        compiler_params=pltpu.CompilerParams(
            dimension_semantics=("parallel", "parallel"),
            vmem_limit_bytes=vmem_limit),
    )(q, k, v, sig, wo, bo)


# ---------------------------------------------------------------------------
# AttentionLayer wrapper (plain-JAX glue around the Pallas kernels)
# ---------------------------------------------------------------------------
class AttentionLayerPallas:
    def __init__(self, d_model, n_heads, key, d_keys=None, d_values=None):
        d_keys = d_keys or d_model // n_heads
        d_values = d_values or d_model // n_heads
        self.n_heads, self.d_keys, self.d_values, self.d_model = (
            n_heads, d_keys, d_values, d_model)

        ks = jax.random.split(key, 10)

        def linear_params(kw, kb, fan_in, fan_out):
            bound = 1.0 / math.sqrt(fan_in)
            w = jax.random.uniform(kw, (fan_in, fan_out), jnp.float32, -bound, bound)
            b = jax.random.uniform(kb, (1, fan_out), jnp.float32, -bound, bound)
            return w, b

        wq, bq = linear_params(ks[0], ks[1], d_model, d_keys * n_heads)
        wk, bk = linear_params(ks[2], ks[3], d_model, d_keys * n_heads)
        wv, bv = linear_params(ks[4], ks[5], d_model, d_values * n_heads)
        ws, bs = linear_params(ks[6], ks[7], d_model, n_heads)
        wo, bo = linear_params(ks[8], ks[9], d_values * n_heads, d_model)
        # f32 originals (for reference checks / exporting).
        self.params_f32 = dict(wq=wq, bq=bq, wk=wk, bk=bk, wv=wv, bv=bv,
                               ws=ws, bs=bs, wo=wo, bo=bo)

        # Fold the softmax scale into the query projection once.
        scale = 1.0 / math.sqrt(d_keys)
        wq_s, bq_s = wq * scale, bq * scale

        # One wide projection weight, pre-cast once to the MXU operand dtype.
        self.w_cat = jnp.concatenate([wq_s, wk, wv, ws], axis=1).astype(_MATMUL_DTYPE)
        self.b_cat = jnp.concatenate([bq_s, bk, bv, bs], axis=1)              # f32

        # Per-stream weights for the (rare) cross-attention fallback path.
        self.wq, self.bq = wq_s.astype(_MATMUL_DTYPE), bq_s
        self.wk, self.bk = wk.astype(_MATMUL_DTYPE), bk
        self.wv, self.bv = wv.astype(_MATMUL_DTYPE), bv
        self.ws, self.bs = ws.astype(_MATMUL_DTYPE), bs

        # Output projection (fused into the attention kernel epilogue).
        self.wo, self.bo = wo.astype(_MATMUL_DTYPE), bo
        # self.norm (LayerNorm) exists in the PyTorch module but is unused in forward().

    def __call__(self, queries, keys, values, attn_mask=None):
        # TODO(synk): attn_mask (mask_flag=True causal path) is not implemented; ignored.
        B, L, d_model = queries.shape
        _, S, _ = keys.shape
        H, E, Dv = self.n_heads, self.d_keys, self.d_values
        assert S == L, "AnomalyAttention prior requires S == L (self-attention window)."

        # Pad the sequence to a lane-dense multiple of 128 so the dominant
        # series/prior stores are unmasked; padded keys are masked in-kernel and
        # everything is sliced back to (L, S) afterwards.
        L_pad = max(_LANE, _round_up(L, _LANE))
        self_attn = (keys is queries) and (values is queries)
        if L_pad != L:
            pad = ((0, 0), (0, L_pad - L), (0, 0))
            queries_p = jnp.pad(queries, pad)
            keys_p = queries_p if self_attn else jnp.pad(keys, pad)
            values_p = queries_p if self_attn else jnp.pad(values, pad)
        else:
            queries_p, keys_p, values_p = queries, keys, values

        xq = queries_p.reshape(B * L_pad, d_model)
        if self_attn:
            # Self-attention fast path: one fused projection reads x once per tile.
            q, k, v, sig = fused_qkvs_projection(
                xq, self.w_cat, self.b_cat, d_qk=H * E, d_v=H * Dv, d_s=H)
        else:
            # Distinct query/key/value streams: tiled per-stream projections.
            q = pallas_linear(xq, self.wq, self.bq, out_dtype=_MATMUL_DTYPE)
            k = pallas_linear(keys_p.reshape(B * L_pad, d_model), self.wk, self.bk,
                              out_dtype=_MATMUL_DTYPE)
            v = pallas_linear(values_p.reshape(B * L_pad, d_model), self.wv, self.bv,
                              out_dtype=_MATMUL_DTYPE)
            sig = pallas_linear(xq, self.ws, self.bs, out_dtype=jnp.float32)

        # Keep the projection layout [B, L, H*E] — no head-split transposes.
        q = q.reshape(B, L_pad, H * E)
        k = k.reshape(B, L_pad, H * E)
        v = v.reshape(B, L_pad, H * Dv)
        sig = sig.reshape(B, L_pad, H)

        out, series, prior, sigma_blh = anomaly_attention(
            q, k, v, sig, self.wo, self.bo,
            n_heads=H, d_keys=E, d_values=Dv, d_model=d_model, s_valid=S)

        # Slice padding away; expand sigma to the reference's [B, H, L, L] shape.
        out = out[:, :L, :]
        series = series[:, :, :L, :S]
        prior = prior[:, :, :L, :S]
        sigma = jnp.broadcast_to(
            jnp.transpose(sigma_blh[:, :L, :], (0, 2, 1))[..., None], (B, H, L, L))
        return out, series, prior, sigma


# ---------------------------------------------------------------------------
# Pure-JAX (f32) reference of the PyTorch forward, for a sanity check.
# ---------------------------------------------------------------------------
def _reference_forward(p, x, n_heads, d_keys, d_values):
    B, L, d_model = x.shape
    H, E, Dv = n_heads, d_keys, d_values
    x2 = x.reshape(B * L, d_model)
    q = (x2 @ p["wq"] + p["bq"]).reshape(B, L, H, E)
    k = (x2 @ p["wk"] + p["bk"]).reshape(B, L, H, E)
    v = (x2 @ p["wv"] + p["bv"]).reshape(B, L, H, Dv)
    sig = (x2 @ p["ws"] + p["bs"]).reshape(B, L, H)
    scale = 1.0 / math.sqrt(E)
    scores = jnp.einsum("blhe,bshe->bhls", q, k) * scale
    series = jax.nn.softmax(scores, axis=-1)
    sigma = jnp.transpose(sig, (0, 2, 1))                               # B H L
    sigma = 3.0 ** (jax.nn.sigmoid(sigma * 5.0) + 1e-5) - 1.0
    sigma = jnp.broadcast_to(sigma[..., None], (B, H, L, L))
    idx = jnp.arange(L, dtype=jnp.float32)
    dist = jnp.abs(idx[:, None] - idx[None, :])
    prior = (1.0 / (math.sqrt(2.0 * math.pi) * sigma)
             * jnp.exp(-(dist ** 2) / (2.0 * sigma ** 2)))
    ctx = jnp.einsum("bhls,bshd->blhd", series, v).reshape(B * L, H * Dv)
    out = (ctx @ p["wo"] + p["bo"]).reshape(B, L, d_model)
    return out, series, prior, sigma


if __name__ == "__main__":
    B, L, d_model, n_heads = 2, 8, 32, 4
    key = jax.random.PRNGKey(0)
    k_param, k_x = jax.random.split(key)

    layer = AttentionLayerPallas(d_model, n_heads, k_param)
    x = jax.random.normal(k_x, (B, L, d_model), dtype=jnp.float32)

    out, series, prior, sigma = layer(x, x, x, None)
    jax.block_until_ready((out, series, prior, sigma))

    H = n_heads
    assert out.shape == (B, L, d_model)
    assert series.shape == (B, H, L, L)
    assert prior.shape == (B, H, L, L)
    assert sigma.shape == (B, H, L, L)

    # Correctness sanity check vs. a pure-JAX f32 reference (loose tolerances:
    # the kernels use bf16 MXU operands with f32 accumulation).
    r_out, r_series, r_prior, r_sigma = _reference_forward(
        layer.params_f32, x, n_heads, layer.d_keys, layer.d_values)
    assert bool(jnp.all(jnp.isfinite(out))) and bool(jnp.all(jnp.isfinite(series)))
    assert bool(jnp.all(jnp.isfinite(prior))) and bool(jnp.all(jnp.isfinite(sigma)))
    assert bool(jnp.allclose(series.sum(-1), 1.0, atol=1e-2)), "softmax rows != 1"
    assert bool(jnp.allclose(out, r_out, rtol=0.1, atol=0.05))
    assert bool(jnp.allclose(series, r_series, rtol=0.1, atol=0.03))
    assert bool(jnp.allclose(prior, r_prior, rtol=0.15, atol=0.02))
    assert bool(jnp.allclose(sigma, r_sigma, rtol=0.1, atol=0.01))

    print("KERNEL_OK")
</pallas_src>

<mosaic_0001>
module attributes {stable_mosaic.version = 11 : i64} {
  func.func @_fused_proj_kernel(%arg0: i32, %arg1: memref<256x32xf32, #tpu.memory_space<vmem>>, %arg2: memref<32x100xbf16, #tpu.memory_space<vmem>>, %arg3: memref<1x100xf32, #tpu.memory_space<vmem>>, %arg4: memref<256x32xbf16, #tpu.memory_space<vmem>>, %arg5: memref<256x32xbf16, #tpu.memory_space<vmem>>, %arg6: memref<256x32xbf16, #tpu.memory_space<vmem>>, %arg7: memref<256x4xf32, #tpu.memory_space<vmem>>) attributes {dimension_semantics = [#tpu.dimension_semantics<parallel>], iteration_bounds = array<i64: 1>, scalar_prefetch = 0 : i64, scratch_operands = 0 : i64, tpu.core_type = #tpu.core_type<tc>, window_params = [{transform_indices = @transform_0, window_bounds = array<i64: 256, 32>}, {pipeline_mode = #tpu.pipeline_mode<synchronous>, transform_indices = @transform_1, window_bounds = array<i64: 32, 100>}, {pipeline_mode = #tpu.pipeline_mode<synchronous>, transform_indices = @transform_2, window_bounds = array<i64: 1, 100>}, {transform_indices = @transform_3, window_bounds = array<i64: 256, 32>}, {transform_indices = @transform_4, window_bounds = array<i64: 256, 32>}, {transform_indices = @transform_5, window_bounds = array<i64: 256, 32>}, {transform_indices = @transform_6, window_bounds = array<i64: 256, 4>}]} {
    %c0 = arith.constant 0 : index
    %c0_0 = arith.constant 0 : index
    %0 = vector.load %arg1[%c0, %c0_0] : memref<256x32xf32, #tpu.memory_space<vmem>>, vector<256x32xf32>
    %1 = arith.truncf %0 : vector<256x32xf32> to vector<256x32xbf16>
    %c0_1 = arith.constant 0 : index
    %c0_2 = arith.constant 0 : index
    %2 = vector.load %arg2[%c0_1, %c0_2] : memref<32x100xbf16, #tpu.memory_space<vmem>>, vector<32x100xbf16>
    %cst = arith.constant dense<0.000000e+00> : vector<256x100xf32>
    %3 = tpu.matmul %1, %2, %cst {dimension_numbers = #tpu.dot_dimension_numbers<[1], [0], [0], [1], [0, 0, 1, 1], [], []>} : vector<256x32xbf16>, vector<32x100xbf16>, vector<256x100xf32> -> vector<256x100xf32>
    %c0_3 = arith.constant 0 : index
    %c0_4 = arith.constant 0 : index
    %4 = vector.load %arg3[%c0_3, %c0_4] : memref<1x100xf32, #tpu.memory_space<vmem>>, vector<1x100xf32>
    %5 = vector.broadcast %4 : vector<1x100xf32> to vector<256x100xf32>
    %6 = arith.addf %3, %5 : vector<256x100xf32>
    %7 = vector.extract_strided_slice %6 {offsets = [0, 0], sizes = [256, 32], strides = [1, 1]} : vector<256x100xf32> to vector<256x32xf32>
    %8 = arith.truncf %7 : vector<256x32xf32> to vector<256x32xbf16>
    %c0_5 = arith.constant 0 : index
    %c0_6 = arith.constant 0 : index
    %9 = vector.load %arg4[%c0_5, %c0_6] : memref<256x32xbf16, #tpu.memory_space<vmem>>, vector<256x32xbf16>
    tpu.vector_store %arg4[%c0_5, %c0_6], %8 {strides = array<i32>} : memref<256x32xbf16, #tpu.memory_space<vmem>>, vector<256x32xbf16>,
    %10 = vector.extract_strided_slice %6 {offsets = [0, 32], sizes = [256, 32], strides = [1, 1]} : vector<256x100xf32> to vector<256x32xf32>
    %11 = arith.truncf %10 : vector<256x32xf32> to vector<256x32xbf16>
    %c0_7 = arith.constant 0 : index
    %c0_8 = arith.constant 0 : index
    %12 = vector.load %arg5[%c0_7, %c0_8] : memref<256x32xbf16, #tpu.memory_space<vmem>>, vector<256x32xbf16>
    tpu.vector_store %arg5[%c0_7, %c0_8], %11 {strides = array<i32>} : memref<256x32xbf16, #tpu.memory_space<vmem>>, vector<256x32xbf16>,
    %13 = vector.extract_strided_slice %6 {offsets = [0, 64], sizes = [256, 32], strides = [1, 1]} : vector<256x100xf32> to vector<256x32xf32>
    %14 = arith.truncf %13 : vector<256x32xf32> to vector<256x32xbf16>
    %c0_9 = arith.constant 0 : index
    %c0_10 = arith.constant 0 : index
    %15 = vector.load %arg6[%c0_9, %c0_10] : memref<256x32xbf16, #tpu.memory_space<vmem>>, vector<256x32xbf16>
    tpu.vector_store %arg6[%c0_9, %c0_10], %14 {strides = array<i32>} : memref<256x32xbf16, #tpu.memory_space<vmem>>, vector<256x32xbf16>,
    %16 = vector.extract_strided_slice %6 {offsets = [0, 96], sizes = [256, 4], strides = [1, 1]} : vector<256x100xf32> to vector<256x4xf32>
    %c0_11 = arith.constant 0 : index
    %c0_12 = arith.constant 0 : index
    %17 = vector.load %arg7[%c0_11, %c0_12] : memref<256x4xf32, #tpu.memory_space<vmem>>, vector<256x4xf32>
    tpu.vector_store %arg7[%c0_11, %c0_12], %16 {strides = array<i32>} : memref<256x4xf32, #tpu.memory_space<vmem>>, vector<256x4xf32>,
    return
  }
  func.func @transform_0(%arg0: i32) -> (i32, i32) {
    %c0_i32 = arith.constant 0 : i32
    %c0_i32_0 = arith.constant 0 : i32
    return %arg0, %c0_i32 : i32, i32
  }
  func.func @transform_1(%arg0: i32) -> (i32, i32) {
    %c0_i32 = arith.constant 0 : i32
    %c0_i32_0 = arith.constant 0 : i32
    %c0_i32_1 = arith.constant 0 : i32
    return %c0_i32, %c0_i32_0 : i32, i32
  }
  func.func @transform_2(%arg0: i32) -> (i32, i32) {
    %c0_i32 = arith.constant 0 : i32
    %c0_i32_0 = arith.constant 0 : i32
    %c0_i32_1 = arith.constant 0 : i32
    return %c0_i32, %c0_i32_0 : i32, i32
  }
  func.func @transform_3(%arg0: i32) -> (i32, i32) {
    %c0_i32 = arith.constant 0 : i32
    %c0_i32_0 = arith.constant 0 : i32
    return %arg0, %c0_i32 : i32, i32
  }
  func.func @transform_4(%arg0: i32) -> (i32, i32) {
    %c0_i32 = arith.constant 0 : i32
    %c0_i32_0 = arith.constant 0 : i32
    return %arg0, %c0_i32 : i32, i32
  }
  func.func @transform_5(%arg0: i32) -> (i32, i32) {
    %c0_i32 = arith.constant 0 : i32
    %c0_i32_0 = arith.constant 0 : i32
    return %arg0, %c0_i32 : i32, i32
  }
  func.func @transform_6(%arg0: i32) -> (i32, i32) {
    %c0_i32 = arith.constant 0 : i32
    %c0_i32_0 = arith.constant 0 : i32
    return %arg0, %c0_i32 : i32, i32
  }
}

</mosaic_0001>

<llo_original>
// kernel: tpu_custom_call.1
$region0: #{tpu_custom_call.1}
  #allocation0 [shape = 'u32[]', space=smem, size = 0x4, offset = 0x4, fixed_abs, tag = 'smem constant byte address 0x4 - core index']
  #allocation1 [shape = 'u32[144,128]{1,0:T(1,128)}', space=vmem, size = 0x12000, scoped, tag = 'internal scratch']
  %s0 = inlined_call_operand.vmem [shape: f32[256,32], index: 0, kind: input, shape index: {}]
  %s1 = inlined_call_operand.vmem [shape: bf16[32,100], index: 1, kind: input, shape index: {}]
  %s2 = inlined_call_operand.vmem [shape: f32[1,100], index: 2, kind: input, shape index: {}]
  %s3 = inlined_call_operand.vmem [shape: bf16[256,32], index: 3, kind: output, shape index: {0}]
  %s4 = inlined_call_operand.vmem [shape: bf16[256,32], index: 4, kind: output, shape index: {1}]
  %s5 = inlined_call_operand.vmem [shape: bf16[256,32], index: 5, kind: output, shape index: {2}]
  %s6 = inlined_call_operand.vmem [shape: f32[256,4], index: 6, kind: output, shape index: {3}]
  %7 = xla_tuple %s3, %s4, %s5, %s6
  %s8 = sld [smem:[#allocation0]]
  $region46: #{tpu_custom_call.1} parent=0
    _
  %s10 = ssub.s32 1, %s8
  %s11 = scalar_select 0, %s10, %s8
  // Predicated region
  $region2: #{tpu_custom_call.1} parent=0 // pred_check
    _
  $region3: #{tpu_custom_call.1} parent=0 // pred_check_branch
    %13 = sbr.rel (0) target = $region5
  $region4: #{tpu_custom_call.1} parent=0 // pred_region
    _
  $region5: #{tpu_custom_call.1} parent=0 // pred_fallthru
    _
  // Predicated region
  $region6: #{tpu_custom_call.1} parent=0 // pred_check
    _
  $region7: #{tpu_custom_call.1} parent=0 // pred_check_branch
    %15 = sbr.rel (0) target = $region9
  $region8: #{tpu_custom_call.1} parent=0 // pred_region
    _
  $region9: #{tpu_custom_call.1} parent=0 // pred_fallthru
    _
  // Predicated region
  $region10: #{tpu_custom_call.1} parent=0 // pred_check
    _
  $region11: #{tpu_custom_call.1} parent=0 // pred_check_branch
    %17 = sbr.rel (0) target = $region13
  $region12: #{tpu_custom_call.1} parent=0 // pred_region
    _
  $region13: #{tpu_custom_call.1} parent=0 // pred_fallthru
    _
  %v19 = vld [vmem:[%s0] sm:$0xff]
  %v20 = vld [vmem:[%s0 + $0x8] sm:$0xff]
  %v21 = vld [vmem:[%s0 + $0x10] sm:$0xff]
  %v22 = vld [vmem:[%s0 + $0x18] sm:$0xff]
  %v23 = vld [vmem:[%s0 + $0x20] sm:$0xff]
  %v24 = vld [vmem:[%s0 + $0x28] sm:$0xff]
  %v25 = vld [vmem:[%s0 + $0x30] sm:$0xff]
  %v26 = vld [vmem:[%s0 + $0x38] sm:$0xff]
  %v27 = vld [vmem:[%s0 + $0x40] sm:$0xff]
  %v28 = vld [vmem:[%s0 + $0x48] sm:$0xff]
  %v29 = vld [vmem:[%s0 + $0x50] sm:$0xff]
  %v30 = vld [vmem:[%s0 + $0x58] sm:$0xff]
  %v31 = vld [vmem:[%s0 + $0x60] sm:$0xff]
  %v32 = vld [vmem:[%s0 + $0x68] sm:$0xff]
  %v33 = vld [vmem:[%s0 + $0x70] sm:$0xff]
  %v34 = vld [vmem:[%s0 + $0x78] sm:$0xff]
  %v35 = vld [vmem:[%s0 + $0x80] sm:$0xff]
  %v36 = vld [vmem:[%s0 + $0x88] sm:$0xff]
  %v37 = vld [vmem:[%s0 + $0x90] sm:$0xff]
  %v38 = vld [vmem:[%s0 + $0x98] sm:$0xff]
  %v39 = vld [vmem:[%s0 + $0xa0] sm:$0xff]
  %v40 = vld [vmem:[%s0 + $0xa8] sm:$0xff]
  %v41 = vld [vmem:[%s0 + $0xb0] sm:$0xff]
  %v42 = vld [vmem:[%s0 + $0xb8] sm:$0xff]
  %v43 = vld [vmem:[%s0 + $0xc0] sm:$0xff]
  %v44 = vld [vmem:[%s0 + $0xc8] sm:$0xff]
  %v45 = vld [vmem:[%s0 + $0xd0] sm:$0xff]
  %v46 = vld [vmem:[%s0 + $0xd8] sm:$0xff]
  %v47 = vld [vmem:[%s0 + $0xe0] sm:$0xff]
  %v48 = vld [vmem:[%s0 + $0xe8] sm:$0xff]
  %v49 = vld [vmem:[%s0 + $0xf0] sm:$0xff]
  %v50 = vld [vmem:[%s0 + $0xf8] sm:$0xff]
  %v51 = vpack.c.bf16 %v20, %v19
  %v52 = vpack.c.bf16 %v22, %v21
  %v53 = vpack.c.bf16 %v24, %v23
  %v54 = vpack.c.bf16 %v26, %v25
  %v55 = vpack.c.bf16 %v28, %v27
  %v56 = vpack.c.bf16 %v30, %v29
  %v57 = vpack.c.bf16 %v32, %v31
  %v58 = vpack.c.bf16 %v34, %v33
  %v59 = vpack.c.bf16 %v36, %v35
  %v60 = vpack.c.bf16 %v38, %v37
  %v61 = vpack.c.bf16 %v40, %v39
  %v62 = vpack.c.bf16 %v42, %v41
  %v63 = vpack.c.bf16 %v44, %v43
  %v64 = vpack.c.bf16 %v46, %v45
  %v65 = vpack.c.bf16 %v48, %v47
  %v66 = vpack.c.bf16 %v50, %v49
  %v67 = vld [vmem:[%s1] sm:$0xf]
  %v68 = vld [vmem:[%s1 + $0x4] sm:$0xf]
  %v69 = vld [vmem:[%s1 + $0x8] sm:$0xf]
  %v70 = vld [vmem:[%s1 + $0xc] sm:$0xf]
  %v71 = vld [vmem:[%s2] sm:$0x1]
  %v73 = vlaneseq
  %v74 = vshrl.u32 %v73, 7
  %v75 = vsub.s32 0, %v74
  %v76 = vrot.slane %v71, %v75
  %v82 = vunpack.c.l.b16 %v67
  %v83 = vunpack.c.l.b16 %v68
  %v84 = vunpack.c.l.b16 %v69
  %v85 = vunpack.c.l.b16 %v70
  %v86 = vpack.c.b16 %v83, %v82
  %v87 = vpack.c.b16 %v85, %v84
  %vm90 = vcmask 261120
  %v92 = vsel %vm90, %v51, 0
  %v95 = vsel %vm90, %v52, 0
  %v98 = vsel %vm90, %v53, 0
  %v101 = vsel %vm90, %v54, 0
  %v104 = vsel %vm90, %v55, 0
  %v107 = vsel %vm90, %v56, 0
  %v110 = vsel %vm90, %v57, 0
  %v113 = vsel %vm90, %v58, 0
  %v116 = vsel %vm90, %v59, 0
  %v119 = vsel %vm90, %v60, 0
  %v122 = vsel %vm90, %v61, 0
  %v125 = vsel %vm90, %v62, 0
  %v128 = vsel %vm90, %v63, 0
  %v131 = vsel %vm90, %v64, 0
  %v134 = vsel %vm90, %v65, 0
  %v137 = vsel %vm90, %v66, 0
  %139 = vmatprep.subr.bf16.mxu0 0
  %140 = vmatpush1.bf16.msra.mxu0 %v86
  %141 = vmatprep.subr.bf16.mxu0 0
  %142 = vmatpush1.bf16.msra.mxu0 %v87
  %143 = vmatprep.subr.bf16.mxu0 0
  %144 = vmatpush1.bf16.msra.mxu0 0
  %145 = vmatprep.subr.bf16.mxu0 0
  %146 = vmatpush1.bf16.msra.mxu0 0
  %147 = vmatprep.subr.bf16.mxu0 0
  %148 = vmatpush1.bf16.msra.mxu0 0
  %149 = vmatprep.subr.bf16.mxu0 0
  %150 = vmatpush1.bf16.msra.mxu0 0
  %151 = vmatprep.subr.bf16.mxu0 0
  %152 = vmatpush1.bf16.msra.mxu0 0
  %153 = vmatprep.subr.bf16.mxu0 0
  %154 = vmatpush1.bf16.msra.mxu0 0
  %155 = vmatprep.subr.bf16.mxu0 0
  %156 = vmatpush1.bf16.msra.mxu0 0
  %157 = vmatprep.subr.bf16.mxu0 0
  %158 = vmatpush1.bf16.msra.mxu0 0
  %159 = vmatprep.subr.bf16.mxu0 0
  %160 = vmatpush1.bf16.msra.mxu0 0
  %161 = vmatprep.subr.bf16.mxu0 0
  %162 = vmatpush1.bf16.msra.mxu0 0
  %163 = vmatprep.subr.bf16.mxu0 0
  %164 = vmatpush1.bf16.msra.mxu0 0
  %165 = vmatprep.subr.bf16.mxu0 0
  %166 = vmatpush1.bf16.msra.mxu0 0
  %167 = vmatprep.subr.bf16.mxu0 0
  %168 = vmatpush1.bf16.msra.mxu0 0
  %169 = vmatprep.subr.bf16.mxu0 0
  %170 = vmatpush1.bf16.msra.mxu0 0
  %171 = vmatprep.mubr.bf16.mxu0 0
  %172 = vmatmul.mubr.bf16.gmra.mrb[0].mxu0 %v92
  %v173 = vpop.f32.mrb[0].mxu0
  %v174 = vadd.f32 %v76, %v173
  %v175 = vpop.f32.mrb[0].mxu0
  %v176 = vpop.f32.mrb[0].mxu0
  %v177 = vadd.f32 %v76, %v176
  %v178 = vpop.f32.mrb[0].mxu0
  %179 = vmatprep.mubr.bf16.mxu0 0
  %180 = vmatmul.mubr.bf16.gmra.mrb[0].mxu0 %v95
  %v181 = vpop.f32.mrb[0].mxu0
  %v182 = vadd.f32 %v76, %v181
  %v183 = vpop.f32.mrb[0].mxu0
  %v184 = vpop.f32.mrb[0].mxu0
  %v185 = vadd.f32 %v76, %v184
  %v186 = vpop.f32.mrb[0].mxu0
  %187 = vmatprep.mubr.bf16.mxu0 0
  %188 = vmatmul.mubr.bf16.gmra.mrb[0].mxu0 %v98
  %v189 = vpop.f32.mrb[0].mxu0
  %v190 = vadd.f32 %v76, %v189
  %v191 = vpop.f32.mrb[0].mxu0
  %v192 = vpop.f32.mrb[0].mxu0
  %v193 = vadd.f32 %v76, %v192
  %v194 = vpop.f32.mrb[0].mxu0
  %195 = vmatprep.mubr.bf16.mxu0 0
  %196 = vmatmul.mubr.bf16.gmra.mrb[0].mxu0 %v101
  %v197 = vpop.f32.mrb[0].mxu0
  %v198 = vadd.f32 %v76, %v197
  %v199 = vpop.f32.mrb[0].mxu0
  %v200 = vpop.f32.mrb[0].mxu0
  %v201 = vadd.f32 %v76, %v200
  %v202 = vpop.f32.mrb[0].mxu0
  %203 = vmatprep.mubr.bf16.mxu0 0
  %204 = vmatmul.mubr.bf16.gmra.mrb[0].mxu0 %v104
  %v205 = vpop.f32.mrb[0].mxu0
  %v206 = vadd.f32 %v76, %v205
  %v207 = vpop.f32.mrb[0].mxu0
  %v208 = vpop.f32.mrb[0].mxu0
  %v209 = vadd.f32 %v76, %v208
  %v210 = vpop.f32.mrb[0].mxu0
  %211 = vmatprep.mubr.bf16.mxu0 0
  %212 = vmatmul.mubr.bf16.gmra.mrb[0].mxu0 %v107
  %v213 = vpop.f32.mrb[0].mxu0
  %v214 = vadd.f32 %v76, %v213
  %v215 = vpop.f32.mrb[0].mxu0
  %v216 = vpop.f32.mrb[0].mxu0
  %v217 = vadd.f32 %v76, %v216
  %v218 = vpop.f32.mrb[0].mxu0
  %219 = vmatprep.mubr.bf16.mxu0 0
  %220 = vmatmul.mubr.bf16.gmra.mrb[0].mxu0 %v110
  %v221 = vpop.f32.mrb[0].mxu0
  %v222 = vadd.f32 %v76, %v221
  %v223 = vpop.f32.mrb[0].mxu0
  %v224 = vpop.f32.mrb[0].mxu0
  %v225 = vadd.f32 %v76, %v224
  %v226 = vpop.f32.mrb[0].mxu0
  %227 = vmatprep.mubr.bf16.mxu0 0
  %228 = vmatmul.mubr.bf16.gmra.mrb[0].mxu0 %v113
  %v229 = vpop.f32.mrb[0].mxu0
  %v230 = vadd.f32 %v76, %v229
  %v231 = vpop.f32.mrb[0].mxu0
  %v232 = vpop.f32.mrb[0].mxu0
  %v233 = vadd.f32 %v76, %v232
  %v234 = vpop.f32.mrb[0].mxu0
  %235 = vmatprep.mubr.bf16.mxu0 0
  %236 = vmatmul.mubr.bf16.gmra.mrb[0].mxu0 %v116
  %v237 = vpop.f32.mrb[0].mxu0
  %v238 = vadd.f32 %v76, %v237
  %v239 = vpop.f32.mrb[0].mxu0
  %v240 = vpop.f32.mrb[0].mxu0
  %v241 = vadd.f32 %v76, %v240
  %v242 = vpop.f32.mrb[0].mxu0
  %243 = vmatprep.mubr.bf16.mxu0 0
  %244 = vmatmul.mubr.bf16.gmra.mrb[0].mxu0 %v119
  %v245 = vpop.f32.mrb[0].mxu0
  %v246 = vadd.f32 %v76, %v245
  %v247 = vpop.f32.mrb[0].mxu0
  %v248 = vpop.f32.mrb[0].mxu0
  %v249 = vadd.f32 %v76, %v248
  %v250 = vpop.f32.mrb[0].mxu0
  %251 = vmatprep.mubr.bf16.mxu0 0
  %252 = vmatmul.mubr.bf16.gmra.mrb[0].mxu0 %v122
  %v253 = vpop.f32.mrb[0].mxu0
  %v254 = vadd.f32 %v76, %v253
  %v255 = vpop.f32.mrb[0].mxu0
  %v256 = vpop.f32.mrb[0].mxu0
  %v257 = vadd.f32 %v76, %v256
  %v258 = vpop.f32.mrb[0].mxu0
  %259 = vmatprep.mubr.bf16.mxu0 0
  %260 = vmatmul.mubr.bf16.gmra.mrb[0].mxu0 %v125
  %v261 = vpop.f32.mrb[0].mxu0
  %v262 = vadd.f32 %v76, %v261
  %v263 = vpop.f32.mrb[0].mxu0
  %v264 = vpop.f32.mrb[0].mxu0
  %v265 = vadd.f32 %v76, %v264
  %v266 = vpop.f32.mrb[0].mxu0
  %267 = vmatprep.mubr.bf16.mxu0 0
  %268 = vmatmul.mubr.bf16.gmra.mrb[0].mxu0 %v128
  %v269 = vpop.f32.mrb[0].mxu0
  %v270 = vadd.f32 %v76, %v269
  %v271 = vpop.f32.mrb[0].mxu0
  %v272 = vpop.f32.mrb[0].mxu0
  %v273 = vadd.f32 %v76, %v272
  %v274 = vpop.f32.mrb[0].mxu0
  %275 = vmatprep.mubr.bf16.mxu0 0
  %276 = vmatmul.mubr.bf16.gmra.mrb[0].mxu0 %v131
  %v277 = vpop.f32.mrb[0].mxu0
  %v278 = vadd.f32 %v76, %v277
  %v279 = vpop.f32.mrb[0].mxu0
  %v280 = vpop.f32.mrb[0].mxu0
  %v281 = vadd.f32 %v76, %v280
  %v282 = vpop.f32.mrb[0].mxu0
  %283 = vmatprep.mubr.bf16.mxu0 0
  %284 = vmatmul.mubr.bf16.gmra.mrb[0].mxu0 %v134
  %v285 = vpop.f32.mrb[0].mxu0
  %v286 = vadd.f32 %v76, %v285
  %v287 = vpop.f32.mrb[0].mxu0
  %v288 = vpop.f32.mrb[0].mxu0
  %v289 = vadd.f32 %v76, %v288
  %v290 = vpop.f32.mrb[0].mxu0
  %291 = vmatprep.mubr.bf16.mxu0 0
  %292 = vmatmul.mubr.bf16.gmra.mrb[0].mxu0 %v137
  %v293 = vpop.f32.mrb[0].mxu0
  %v294 = vadd.f32 %v76, %v293
  %v295 = vpop.f32.mrb[0].mxu0
  %v296 = vpop.f32.mrb[0].mxu0
  %v297 = vadd.f32 %v76, %v296
  %v298 = vpop.f32.mrb[0].mxu0
  %299 = vdwg.mxu0
  %v300 = vpack.c.bf16 %v177, %v174
  %v301 = vpack.c.bf16 %v185, %v182
  %v302 = vpack.c.bf16 %v193, %v190
  %v303 = vpack.c.bf16 %v201, %v198
  %v304 = vpack.c.bf16 %v209, %v206
  %v305 = vpack.c.bf16 %v217, %v214
  %v306 = vpack.c.bf16 %v225, %v222
  %v307 = vpack.c.bf16 %v233, %v230
  %v308 = vpack.c.bf16 %v241, %v238
  %v309 = vpack.c.bf16 %v249, %v246
  %v310 = vpack.c.bf16 %v257, %v254
  %v311 = vpack.c.bf16 %v265, %v262
  %v312 = vpack.c.bf16 %v273, %v270
  %v313 = vpack.c.bf16 %v281, %v278
  %v314 = vpack.c.bf16 %v289, %v286
  %v315 = vpack.c.bf16 %v297, %v294
  %v332 = vunpack.c.l.b16 %v300
  %v333 = vunpack.c.h.b16 %v300
  %v334 = vunpack.c.l.b16 %v301
  %v335 = vunpack.c.h.b16 %v301
  %v336 = vunpack.c.l.b16 %v302
  %v337 = vunpack.c.h.b16 %v302
  %v338 = vunpack.c.l.b16 %v303
  %v339 = vunpack.c.h.b16 %v303
  %v340 = vunpack.c.l.b16 %v304
  %v341 = vunpack.c.h.b16 %v304
  %v342 = vunpack.c.l.b16 %v305
  %v343 = vunpack.c.h.b16 %v305
  %v344 = vunpack.c.l.b16 %v306
  %v345 = vunpack.c.h.b16 %v306
  %v346 = vunpack.c.l.b16 %v307
  %v347 = vunpack.c.h.b16 %v307
  %v348 = vunpack.c.l.b16 %v308
  %v349 = vunpack.c.h.b16 %v308
  %v350 = vunpack.c.l.b16 %v309
  %v351 = vunpack.c.h.b16 %v309
  %v352 = vunpack.c.l.b16 %v310
  %v353 = vunpack.c.h.b16 %v310
  %v354 = vunpack.c.l.b16 %v311
  %v355 = vunpack.c.h.b16 %v311
  %v356 = vunpack.c.l.b16 %v312
  %v357 = vunpack.c.h.b16 %v312
  %v358 = vunpack.c.l.b16 %v313
  %v359 = vunpack.c.h.b16 %v313
  %v360 = vunpack.c.l.b16 %v314
  %v361 = vunpack.c.h.b16 %v314
  %v362 = vunpack.c.l.b16 %v315
  %v363 = vunpack.c.h.b16 %v315
  %v364 = vpack.c.b16 %v332, %v332
  %v365 = vpack.c.b16 %v333, %v333
  %v366 = vpack.c.b16 %v334, %v334
  %v367 = vpack.c.b16 %v335, %v335
  %v368 = vpack.c.b16 %v336, %v336
  %v369 = vpack.c.b16 %v337, %v337
  %v370 = vpack.c.b16 %v338, %v338
  %v371 = vpack.c.b16 %v339, %v339
  %v372 = vpack.c.b16 %v340, %v340
  %v373 = vpack.c.b16 %v341, %v341
  %v374 = vpack.c.b16 %v342, %v342
  %v375 = vpack.c.b16 %v343, %v343
  %v376 = vpack.c.b16 %v344, %v344
  %v377 = vpack.c.b16 %v345, %v345
  %v378 = vpack.c.b16 %v346, %v346
  %v379 = vpack.c.b16 %v347, %v347
  %v380 = vpack.c.b16 %v348, %v348
  %v381 = vpack.c.b16 %v349, %v349
  %v382 = vpack.c.b16 %v350, %v350
  %v383 = vpack.c.b16 %v351, %v351
  %v384 = vpack.c.b16 %v352, %v352
  %v385 = vpack.c.b16 %v353, %v353
  %v386 = vpack.c.b16 %v354, %v354
  %v387 = vpack.c.b16 %v355, %v355
  %v388 = vpack.c.b16 %v356, %v356
  %v389 = vpack.c.b16 %v357, %v357
  %v390 = vpack.c.b16 %v358, %v358
  %v391 = vpack.c.b16 %v359, %v359
  %v392 = vpack.c.b16 %v360, %v360
  %v393 = vpack.c.b16 %v361, %v361
  %v394 = vpack.c.b16 %v362, %v362
  %v395 = vpack.c.b16 %v363, %v363
  %vm428 = vcmask 257024
  %429 = vst.msk [vmem:[%s3] sm:$0xf] %vm428, %v364
  %430 = vst.msk [vmem:[%s3 + $0x4] sm:$0xf] %vm428, %v365
  %431 = vst.msk [vmem:[%s3 + $0x8] sm:$0xf] %vm428, %v366
  %432 = vst.msk [vmem:[%s3 + $0xc] sm:$0xf] %vm428, %v367
  %433 = vst.msk [vmem:[%s3 + $0x10] sm:$0xf] %vm428, %v368
  %434 = vst.msk [vmem:[%s3 + $0x14] sm:$0xf] %vm428, %v369
  %435 = vst.msk [vmem:[%s3 + $0x18] sm:$0xf] %vm428, %v370
  %436 = vst.msk [vmem:[%s3 + $0x1c] sm:$0xf] %vm428, %v371
  %437 = vst.msk [vmem:[%s3 + $0x20] sm:$0xf] %vm428, %v372
  %438 = vst.msk [vmem:[%s3 + $0x24] sm:$0xf] %vm428, %v373
  %439 = vst.msk [vmem:[%s3 + $0x28] sm:$0xf] %vm428, %v374
  %440 = vst.msk [vmem:[%s3 + $0x2c] sm:$0xf] %vm428, %v375
  %441 = vst.msk [vmem:[%s3 + $0x30] sm:$0xf] %vm428, %v376
  %442 = vst.msk [vmem:[%s3 + $0x34] sm:$0xf] %vm428, %v377
  %443 = vst.msk [vmem:[%s3 + $0x38] sm:$0xf] %vm428, %v378
  %444 = vst.msk [vmem:[%s3 + $0x3c] sm:$0xf] %vm428, %v379
  %445 = vst.msk [vmem:[%s3 + $0x40] sm:$0xf] %vm428, %v380
  %446 = vst.msk [vmem:[%s3 + $0x44] sm:$0xf] %vm428, %v381
  %447 = vst.msk [vmem:[%s3 + $0x48] sm:$0xf] %vm428, %v382
  %448 = vst.msk [vmem:[%s3 + $0x4c] sm:$0xf] %vm428, %v383
  %449 = vst.msk [vmem:[%s3 + $0x50] sm:$0xf] %vm428, %v384
  %450 = vst.msk [vmem:[%s3 + $0x54] sm:$0xf] %vm428, %v385
  %451 = vst.msk [vmem:[%s3 + $0x58] sm:$0xf] %vm428, %v386
  %452 = vst.msk [vmem:[%s3 + $0x5c] sm:$0xf] %vm428, %v387
  %453 = vst.msk [vmem:[%s3 + $0x60] sm:$0xf] %vm428, %v388
  %454 = vst.msk [vmem:[%s3 + $0x64] sm:$0xf] %vm428, %v389
  %455 = vst.msk [vmem:[%s3 + $0x68] sm:$0xf] %vm428, %v390
  %456 = vst.msk [vmem:[%s3 + $0x6c] sm:$0xf] %vm428, %v391
  %457 = vst.msk [vmem:[%s3 + $0x70] sm:$0xf] %vm428, %v392
  %458 = vst.msk [vmem:[%s3 + $0x74] sm:$0xf] %vm428, %v393
  %459 = vst.msk [vmem:[%s3 + $0x78] sm:$0xf] %vm428, %v394
  %460 = vst.msk [vmem:[%s3 + $0x7c] sm:$0xf] %vm428, %v395
  %461 = vrot.lane.b32.xlu0 %v364, 96
  %v462 = vpop.permute.xlu0 %461
  %463 = vrot.lane.b32.xlu0 %v365, 96
  %v464 = vpop.permute.xlu0 %463
  %465 = vrot.lane.b32.xlu0 %v366, 96
  %v466 = vpop.permute.xlu0 %465
  %467 = vrot.lane.b32.xlu0 %v367, 96
  %v468 = vpop.permute.xlu0 %467
  %469 = vrot.lane.b32.xlu0 %v368, 96
  %v470 = vpop.permute.xlu0 %469
  %471 = vrot.lane.b32.xlu0 %v369, 96
  %v472 = vpop.permute.xlu0 %471
  %473 = vrot.lane.b32.xlu0 %v370, 96
  %v474 = vpop.permute.xlu0 %473
  %475 = vrot.lane.b32.xlu0 %v371, 96
  %v476 = vpop.permute.xlu0 %475
  %477 = vrot.lane.b32.xlu0 %v372, 96
  %v478 = vpop.permute.xlu0 %477
  %479 = vrot.lane.b32.xlu0 %v373, 96
  %v480 = vpop.permute.xlu0 %479
  %481 = vrot.lane.b32.xlu0 %v374, 96
  %v482 = vpop.permute.xlu0 %481
  %483 = vrot.lane.b32.xlu0 %v375, 96
  %v484 = vpop.permute.xlu0 %483
  %485 = vrot.lane.b32.xlu0 %v376, 96
  %v486 = vpop.permute.xlu0 %485
  %487 = vrot.lane.b32.xlu0 %v377, 96
  %v488 = vpop.permute.xlu0 %487
  %489 = vrot.lane.b32.xlu0 %v378, 96
  %v490 = vpop.permute.xlu0 %489
  %491 = vrot.lane.b32.xlu0 %v379, 96
  %v492 = vpop.permute.xlu0 %491
  %493 = vrot.lane.b32.xlu0 %v380, 96
  %v494 = vpop.permute.xlu0 %493
  %495 = vrot.lane.b32.xlu0 %v381, 96
  %v496 = vpop.permute.xlu0 %495
  %497 = vrot.lane.b32.xlu0 %v382, 96
  %v498 = vpop.permute.xlu0 %497
  %499 = vrot.lane.b32.xlu0 %v383, 96
  %v500 = vpop.permute.xlu0 %499
  %501 = vrot.lane.b32.xlu0 %v384, 96
  %v502 = vpop.permute.xlu0 %501
  %503 = vrot.lane.b32.xlu0 %v385, 96
  %v504 = vpop.permute.xlu0 %503
  %505 = vrot.lane.b32.xlu0 %v386, 96
  %v506 = vpop.permute.xlu0 %505
  %507 = vrot.lane.b32.xlu0 %v387, 96
  %v508 = vpop.permute.xlu0 %507
  %509 = vrot.lane.b32.xlu0 %v388, 96
  %v510 = vpop.permute.xlu0 %509
  %511 = vrot.lane.b32.xlu0 %v389, 96
  %v512 = vpop.permute.xlu0 %511
  %513 = vrot.lane.b32.xlu0 %v390, 96
  %v514 = vpop.permute.xlu0 %513
  %515 = vrot.lane.b32.xlu0 %v391, 96
  %v516 = vpop.permute.xlu0 %515
  %517 = vrot.lane.b32.xlu0 %v392, 96
  %v518 = vpop.permute.xlu0 %517
  %519 = vrot.lane.b32.xlu0 %v393, 96
  %v520 = vpop.permute.xlu0 %519
  %521 = vrot.lane.b32.xlu0 %v394, 96
  %v522 = vpop.permute.xlu0 %521
  %523 = vrot.lane.b32.xlu0 %v395, 96
  %v524 = vpop.permute.xlu0 %523
  %557 = vst.msk [vmem:[%s4] sm:$0xf] %vm428, %v462
  %558 = vst.msk [vmem:[%s4 + $0x4] sm:$0xf] %vm428, %v464
  %559 = vst.msk [vmem:[%s4 + $0x8] sm:$0xf] %vm428, %v466
  %560 = vst.msk [vmem:[%s4 + $0xc] sm:$0xf] %vm428, %v468
  %561 = vst.msk [vmem:[%s4 + $0x10] sm:$0xf] %vm428, %v470
  %562 = vst.msk [vmem:[%s4 + $0x14] sm:$0xf] %vm428, %v472
  %563 = vst.msk [vmem:[%s4 + $0x18] sm:$0xf] %vm428, %v474
  %564 = vst.msk [vmem:[%s4 + $0x1c] sm:$0xf] %vm428, %v476
  %565 = vst.msk [vmem:[%s4 + $0x20] sm:$0xf] %vm428, %v478
  %566 = vst.msk [vmem:[%s4 + $0x24] sm:$0xf] %vm428, %v480
  %567 = vst.msk [vmem:[%s4 + $0x28] sm:$0xf] %vm428, %v482
  %568 = vst.msk [vmem:[%s4 + $0x2c] sm:$0xf] %vm428, %v484
  %569 = vst.msk [vmem:[%s4 + $0x30] sm:$0xf] %vm428, %v486
  %570 = vst.msk [vmem:[%s4 + $0x34] sm:$0xf] %vm428, %v488
  %571 = vst.msk [vmem:[%s4 + $0x38] sm:$0xf] %vm428, %v490
  %572 = vst.msk [vmem:[%s4 + $0x3c] sm:$0xf] %vm428, %v492
  %573 = vst.msk [vmem:[%s4 + $0x40] sm:$0xf] %vm428, %v494
  %574 = vst.msk [vmem:[%s4 + $0x44] sm:$0xf] %vm428, %v496
  %575 = vst.msk [vmem:[%s4 + $0x48] sm:$0xf] %vm428, %v498
  %576 = vst.msk [vmem:[%s4 + $0x4c] sm:$0xf] %vm428, %v500
  %577 = vst.msk [vmem:[%s4 + $0x50] sm:$0xf] %vm428, %v502
  %578 = vst.msk [vmem:[%s4 + $0x54] sm:$0xf] %vm428, %v504
  %579 = vst.msk [vmem:[%s4 + $0x58] sm:$0xf] %vm428, %v506
  %580 = vst.msk [vmem:[%s4 + $0x5c] sm:$0xf] %vm428, %v508
  %581 = vst.msk [vmem:[%s4 + $0x60] sm:$0xf] %vm428, %v510
  %582 = vst.msk [vmem:[%s4 + $0x64] sm:$0xf] %vm428, %v512
  %583 = vst.msk [vmem:[%s4 + $0x68] sm:$0xf] %vm428, %v514
  %584 = vst.msk [vmem:[%s4 + $0x6c] sm:$0xf] %vm428, %v516
  %585 = vst.msk [vmem:[%s4 + $0x70] sm:$0xf] %vm428, %v518
  %586 = vst.msk [vmem:[%s4 + $0x74] sm:$0xf] %vm428, %v520
  %587 = vst.msk [vmem:[%s4 + $0x78] sm:$0xf] %vm428, %v522
  %588 = vst.msk [vmem:[%s4 + $0x7c] sm:$0xf] %vm428, %v524
  %589 = vrot.lane.b32.xlu0 %v364, 64
  %v590 = vpop.permute.xlu0 %589
  %591 = vrot.lane.b32.xlu0 %v365, 64
  %v592 = vpop.permute.xlu0 %591
  %593 = vrot.lane.b32.xlu0 %v366, 64
  %v594 = vpop.permute.xlu0 %593
  %595 = vrot.lane.b32.xlu0 %v367, 64
  %v596 = vpop.permute.xlu0 %595
  %597 = vrot.lane.b32.xlu0 %v368, 64
  %v598 = vpop.permute.xlu0 %597
  %599 = vrot.lane.b32.xlu0 %v369, 64
  %v600 = vpop.permute.xlu0 %599
  %601 = vrot.lane.b32.xlu0 %v370, 64
  %v602 = vpop.permute.xlu0 %601
  %603 = vrot.lane.b32.xlu0 %v371, 64
  %v604 = vpop.permute.xlu0 %603
  %605 = vrot.lane.b32.xlu0 %v372, 64
  %v606 = vpop.permute.xlu0 %605
  %607 = vrot.lane.b32.xlu0 %v373, 64
  %v608 = vpop.permute.xlu0 %607
  %609 = vrot.lane.b32.xlu0 %v374, 64
  %v610 = vpop.permute.xlu0 %609
  %611 = vrot.lane.b32.xlu0 %v375, 64
  %v612 = vpop.permute.xlu0 %611
  %613 = vrot.lane.b32.xlu0 %v376, 64
  %v614 = vpop.permute.xlu0 %613
  %615 = vrot.lane.b32.xlu0 %v377, 64
  %v616 = vpop.permute.xlu0 %615
  %617 = vrot.lane.b32.xlu0 %v378, 64
  %v618 = vpop.permute.xlu0 %617
  %619 = vrot.lane.b32.xlu0 %v379, 64
  %v620 = vpop.permute.xlu0 %619
  %621 = vrot.lane.b32.xlu0 %v380, 64
  %v622 = vpop.permute.xlu0 %621
  %623 = vrot.lane.b32.xlu0 %v381, 64
  %v624 = vpop.permute.xlu0 %623
  %625 = vrot.lane.b32.xlu0 %v382, 64
  %v626 = vpop.permute.xlu0 %625
  %627 = vrot.lane.b32.xlu0 %v383, 64
  %v628 = vpop.permute.xlu0 %627
  %629 = vrot.lane.b32.xlu0 %v384, 64
  %v630 = vpop.permute.xlu0 %629
  %631 = vrot.lane.b32.xlu0 %v385, 64
  %v632 = vpop.permute.xlu0 %631
  %633 = vrot.lane.b32.xlu0 %v386, 64
  %v634 = vpop.permute.xlu0 %633
  %635 = vrot.lane.b32.xlu0 %v387, 64
  %v636 = vpop.permute.xlu0 %635
  %637 = vrot.lane.b32.xlu0 %v388, 64
  %v638 = vpop.permute.xlu0 %637
  %639 = vrot.lane.b32.xlu0 %v389, 64
  %v640 = vpop.permute.xlu0 %639
  %641 = vrot.lane.b32.xlu0 %v390, 64
  %v642 = vpop.permute.xlu0 %641
  %643 = vrot.lane.b32.xlu0 %v391, 64
  %v644 = vpop.permute.xlu0 %643
  %645 = vrot.lane.b32.xlu0 %v392, 64
  %v646 = vpop.permute.xlu0 %645
  %647 = vrot.lane.b32.xlu0 %v393, 64
  %v648 = vpop.permute.xlu0 %647
  %649 = vrot.lane.b32.xlu0 %v394, 64
  %v650 = vpop.permute.xlu0 %649
  %651 = vrot.lane.b32.xlu0 %v395, 64
  %v652 = vpop.permute.xlu0 %651
  %685 = vst.msk [vmem:[%s5] sm:$0xf] %vm428, %v590
  %686 = vst.msk [vmem:[%s5 + $0x4] sm:$0xf] %vm428, %v592
  %687 = vst.msk [vmem:[%s5 + $0x8] sm:$0xf] %vm428, %v594
  %688 = vst.msk [vmem:[%s5 + $0xc] sm:$0xf] %vm428, %v596
  %689 = vst.msk [vmem:[%s5 + $0x10] sm:$0xf] %vm428, %v598
  %690 = vst.msk [vmem:[%s5 + $0x14] sm:$0xf] %vm428, %v600
  %691 = vst.msk [vmem:[%s5 + $0x18] sm:$0xf] %vm428, %v602
  %692 = vst.msk [vmem:[%s5 + $0x1c] sm:$0xf] %vm428, %v604
  %693 = vst.msk [vmem:[%s5 + $0x20] sm:$0xf] %vm428, %v606
  %694 = vst.msk [vmem:[%s5 + $0x24] sm:$0xf] %vm428, %v608
  %695 = vst.msk [vmem:[%s5 + $0x28] sm:$0xf] %vm428, %v610
  %696 = vst.msk [vmem:[%s5 + $0x2c] sm:$0xf] %vm428, %v612
  %697 = vst.msk [vmem:[%s5 + $0x30] sm:$0xf] %vm428, %v614
  %698 = vst.msk [vmem:[%s5 + $0x34] sm:$0xf] %vm428, %v616
  %699 = vst.msk [vmem:[%s5 + $0x38] sm:$0xf] %vm428, %v618
  %700 = vst.msk [vmem:[%s5 + $0x3c] sm:$0xf] %vm428, %v620
  %701 = vst.msk [vmem:[%s5 + $0x40] sm:$0xf] %vm428, %v622
  %702 = vst.msk [vmem:[%s5 + $0x44] sm:$0xf] %vm428, %v624
  %703 = vst.msk [vmem:[%s5 + $0x48] sm:$0xf] %vm428, %v626
  %704 = vst.msk [vmem:[%s5 + $0x4c] sm:$0xf] %vm428, %v628
  %705 = vst.msk [vmem:[%s5 + $0x50] sm:$0xf] %vm428, %v630
  %706 = vst.msk [vmem:[%s5 + $0x54] sm:$0xf] %vm428, %v632
  %707 = vst.msk [vmem:[%s5 + $0x58] sm:$0xf] %vm428, %v634
  %708 = vst.msk [vmem:[%s5 + $0x5c] sm:$0xf] %vm428, %v636
  %709 = vst.msk [vmem:[%s5 + $0x60] sm:$0xf] %vm428, %v638
  %710 = vst.msk [vmem:[%s5 + $0x64] sm:$0xf] %vm428, %v640
  %711 = vst.msk [vmem:[%s5 + $0x68] sm:$0xf] %vm428, %v642
  %712 = vst.msk [vmem:[%s5 + $0x6c] sm:$0xf] %vm428, %v644
  %713 = vst.msk [vmem:[%s5 + $0x70] sm:$0xf] %vm428, %v646
  %714 = vst.msk [vmem:[%s5 + $0x74] sm:$0xf] %vm428, %v648
  %715 = vst.msk [vmem:[%s5 + $0x78] sm:$0xf] %vm428, %v650
  %716 = vst.msk [vmem:[%s5 + $0x7c] sm:$0xf] %vm428, %v652
  %749 = vrot.lane.b32.xlu0 %v174, 32
  %v750 = vpop.permute.xlu0 %749
  %751 = vrot.lane.b32.xlu0 %v177, 32
  %v752 = vpop.permute.xlu0 %751
  %753 = vrot.lane.b32.xlu0 %v182, 32
  %v754 = vpop.permute.xlu0 %753
  %755 = vrot.lane.b32.xlu0 %v185, 32
  %v756 = vpop.permute.xlu0 %755
  %757 = vrot.lane.b32.xlu0 %v190, 32
  %v758 = vpop.permute.xlu0 %757
  %759 = vrot.lane.b32.xlu0 %v193, 32
  %v760 = vpop.permute.xlu0 %759
  %761 = vrot.lane.b32.xlu0 %v198, 32
  %v762 = vpop.permute.xlu0 %761
  %763 = vrot.lane.b32.xlu0 %v201, 32
  %v764 = vpop.permute.xlu0 %763
  %765 = vrot.lane.b32.xlu0 %v206, 32
  %v766 = vpop.permute.xlu0 %765
  %767 = vrot.lane.b32.xlu0 %v209, 32
  %v768 = vpop.permute.xlu0 %767
  %769 = vrot.lane.b32.xlu0 %v214, 32
  %v770 = vpop.permute.xlu0 %769
  %771 = vrot.lane.b32.xlu0 %v217, 32
  %v772 = vpop.permute.xlu0 %771
  %773 = vrot.lane.b32.xlu0 %v222, 32
  %v774 = vpop.permute.xlu0 %773
  %775 = vrot.lane.b32.xlu0 %v225, 32
  %v776 = vpop.permute.xlu0 %775
  %777 = vrot.lane.b32.xlu0 %v230, 32
  %v778 = vpop.permute.xlu0 %777
  %779 = vrot.lane.b32.xlu0 %v233, 32
  %v780 = vpop.permute.xlu0 %779
  %781 = vrot.lane.b32.xlu0 %v238, 32
  %v782 = vpop.permute.xlu0 %781
  %783 = vrot.lane.b32.xlu0 %v241, 32
  %v784 = vpop.permute.xlu0 %783
  %785 = vrot.lane.b32.xlu0 %v246, 32
  %v786 = vpop.permute.xlu0 %785
  %787 = vrot.lane.b32.xlu0 %v249, 32
  %v788 = vpop.permute.xlu0 %787
  %789 = vrot.lane.b32.xlu0 %v254, 32
  %v790 = vpop.permute.xlu0 %789
  %791 = vrot.lane.b32.xlu0 %v257, 32
  %v792 = vpop.permute.xlu0 %791
  %793 = vrot.lane.b32.xlu0 %v262, 32
  %v794 = vpop.permute.xlu0 %793
  %795 = vrot.lane.b32.xlu0 %v265, 32
  %v796 = vpop.permute.xlu0 %795
  %797 = vrot.lane.b32.xlu0 %v270, 32
  %v798 = vpop.permute.xlu0 %797
  %799 = vrot.lane.b32.xlu0 %v273, 32
  %v800 = vpop.permute.xlu0 %799
  %801 = vrot.lane.b32.xlu0 %v278, 32
  %v802 = vpop.permute.xlu0 %801
  %803 = vrot.lane.b32.xlu0 %v281, 32
  %v804 = vpop.permute.xlu0 %803
  %805 = vrot.lane.b32.xlu0 %v286, 32
  %v806 = vpop.permute.xlu0 %805
  %807 = vrot.lane.b32.xlu0 %v289, 32
  %v808 = vpop.permute.xlu0 %807
  %809 = vrot.lane.b32.xlu0 %v294, 32
  %v810 = vpop.permute.xlu0 %809
  %811 = vrot.lane.b32.xlu0 %v297, 32
  %v812 = vpop.permute.xlu0 %811
  %vm845 = vcmask 31744
  %846 = vst.msk [vmem:[%s6] sm:$0xff] %vm845, %v750
  %847 = vst.msk [vmem:[%s6 + $0x8] sm:$0xff] %vm845, %v752
  %848 = vst.msk [vmem:[%s6 + $0x10] sm:$0xff] %vm845, %v754
  %849 = vst.msk [vmem:[%s6 + $0x18] sm:$0xff] %vm845, %v756
  %850 = vst.msk [vmem:[%s6 + $0x20] sm:$0xff] %vm845, %v758
  %851 = vst.msk [vmem:[%s6 + $0x28] sm:$0xff] %vm845, %v760
  %852 = vst.msk [vmem:[%s6 + $0x30] sm:$0xff] %vm845, %v762
  %853 = vst.msk [vmem:[%s6 + $0x38] sm:$0xff] %vm845, %v764
  %854 = vst.msk [vmem:[%s6 + $0x40] sm:$0xff] %vm845, %v766
  %855 = vst.msk [vmem:[%s6 + $0x48] sm:$0xff] %vm845, %v768
  %856 = vst.msk [vmem:[%s6 + $0x50] sm:$0xff] %vm845, %v770
  %857 = vst.msk [vmem:[%s6 + $0x58] sm:$0xff] %vm845, %v772
  %858 = vst.msk [vmem:[%s6 + $0x60] sm:$0xff] %vm845, %v774
  %859 = vst.msk [vmem:[%s6 + $0x68] sm:$0xff] %vm845, %v776
  %860 = vst.msk [vmem:[%s6 + $0x70] sm:$0xff] %vm845, %v778
  %861 = vst.msk [vmem:[%s6 + $0x78] sm:$0xff] %vm845, %v780
  %862 = vst.msk [vmem:[%s6 + $0x80] sm:$0xff] %vm845, %v782
  %863 = vst.msk [vmem:[%s6 + $0x88] sm:$0xff] %vm845, %v784
  %864 = vst.msk [vmem:[%s6 + $0x90] sm:$0xff] %vm845, %v786
  %865 = vst.msk [vmem:[%s6 + $0x98] sm:$0xff] %vm845, %v788
  %866 = vst.msk [vmem:[%s6 + $0xa0] sm:$0xff] %vm845, %v790
  %867 = vst.msk [vmem:[%s6 + $0xa8] sm:$0xff] %vm845, %v792
  %868 = vst.msk [vmem:[%s6 + $0xb0] sm:$0xff] %vm845, %v794
  %869 = vst.msk [vmem:[%s6 + $0xb8] sm:$0xff] %vm845, %v796
  %870 = vst.msk [vmem:[%s6 + $0xc0] sm:$0xff] %vm845, %v798
  %871 = vst.msk [vmem:[%s6 + $0xc8] sm:$0xff] %vm845, %v800
  %872 = vst.msk [vmem:[%s6 + $0xd0] sm:$0xff] %vm845, %v802
  %873 = vst.msk [vmem:[%s6 + $0xd8] sm:$0xff] %vm845, %v804
  %874 = vst.msk [vmem:[%s6 + $0xe0] sm:$0xff] %vm845, %v806
  %875 = vst.msk [vmem:[%s6 + $0xe8] sm:$0xff] %vm845, %v808
  %876 = vst.msk [vmem:[%s6 + $0xf0] sm:$0xff] %vm845, %v810
  %877 = vst.msk [vmem:[%s6 + $0xf8] sm:$0xff] %vm845, %v812
  // Predicated region
  $region14: #{tpu_custom_call.1} parent=0 // pred_check
    _
  $region15: #{tpu_custom_call.1} parent=0 // pred_check_branch
    %879 = sbr.rel (0) target = $region17
  $region16: #{tpu_custom_call.1} parent=0 // pred_region
    _
  $region17: #{tpu_custom_call.1} parent=0 // pred_fallthru
    _
  // Predicated region
  $region18: #{tpu_custom_call.1} parent=0 // pred_check
    _
  $region19: #{tpu_custom_call.1} parent=0 // pred_check_branch
    %881 = sbr.rel (0) target = $region21
  $region20: #{tpu_custom_call.1} parent=0 // pred_region
    _
  $region21: #{tpu_custom_call.1} parent=0 // pred_fallthru
    _
  // Predicated region
  $region22: #{tpu_custom_call.1} parent=0 // pred_check
    _
  $region23: #{tpu_custom_call.1} parent=0 // pred_check_branch
    %883 = sbr.rel (0) target = $region25
  $region24: #{tpu_custom_call.1} parent=0 // pred_region
    _
  $region25: #{tpu_custom_call.1} parent=0 // pred_fallthru
    _
  // Predicated region
  $region26: #{tpu_custom_call.1} parent=0 // pred_check
    _
  $region27: #{tpu_custom_call.1} parent=0 // pred_check_branch
    %885 = sbr.rel (0) target = $region29
  $region28: #{tpu_custom_call.1} parent=0 // pred_region
    _
  $region29: #{tpu_custom_call.1} parent=0 // pred_fallthru
    _
  // Predicated region
  $region30: #{tpu_custom_call.1} parent=0 // pred_check
    _
  $region31: #{tpu_custom_call.1} parent=0 // pred_check_branch
    %887 = sbr.rel (0) target = $region33
  $region32: #{tpu_custom_call.1} parent=0 // pred_region
    _
  $region33: #{tpu_custom_call.1} parent=0 // pred_fallthru
    _
  // Predicated region
  $region34: #{tpu_custom_call.1} parent=0 // pred_check
    _
  $region35: #{tpu_custom_call.1} parent=0 // pred_check_branch
    %889 = sbr.rel (0) target = $region37
  $region36: #{tpu_custom_call.1} parent=0 // pred_region
    _
  $region37: #{tpu_custom_call.1} parent=0 // pred_fallthru
    _
  // Predicated region
  $region38: #{tpu_custom_call.1} parent=0 // pred_check
    _
  $region39: #{tpu_custom_call.1} parent=0 // pred_check_branch
    %891 = sbr.rel (0) target = $region41
  $region40: #{tpu_custom_call.1} parent=0 // pred_region
    _
  $region41: #{tpu_custom_call.1} parent=0 // pred_fallthru
    _
  // Predicated region
  $region42: #{tpu_custom_call.1} parent=0 // pred_check
    _
  $region43: #{tpu_custom_call.1} parent=0 // pred_check_branch
    %893 = sbr.rel (0) target = $region45
  $region44: #{tpu_custom_call.1} parent=0 // pred_region
    _
  $region45: #{tpu_custom_call.1} parent=0 // pred_fallthru
    _

</llo_original>
